<compile_context>
chip_gen: v6e
topology: v6e:2x2x1
jax: 0.10.0
libtpu: 0.0.40
codegen_flags: <defaults>
</compile_context>

<pallas_src>
from typing import NamedTuple, Optional

import jax
import jax.numpy as jnp
from jax.experimental import pallas as pl
from jax.experimental.pallas import tpu as pltpu


def _round_up(x, m):
    return ((x + m - 1) // m) * m


def _sublane(dtype):
    # sub-32-bit dtypes pack along sublanes: bf16 vreg = [16,128], int8/fp8 = [32,128]
    return {4: 8, 2: 16, 1: 32}.get(jnp.dtype(dtype).itemsize, 8)


def _pick_tile(padded, unit, max_tile):
    """Largest multiple of `unit` that divides `padded` and is <= max_tile."""
    best, t, cap = unit, unit, min(padded, max_tile)
    while t <= cap:
        if padded % t == 0:
            best = t
        t += unit
    return best


def _pick_split_tile(padded, unit, max_tile):
    """Like _pick_tile but requires >= 2 tiles; None if impossible."""
    best, t, cap = None, unit, min(padded, max_tile)
    while t <= cap:
        if padded % t == 0 and padded // t >= 2:
            best = t
        t += unit
    return best


# ----------------------------------------------------------------------------
# Kernels.  Weight arrives pre-transposed as [K, N]  ->  canonical contraction.
# ----------------------------------------------------------------------------
def _mm_kernel_single_k(x_ref, w_ref, b_ref, o_ref):
    # Whole K in one block: no scratch, no phase gating.
    acc = jax.lax.dot_general(
        x_ref[...], w_ref[...],
        dimension_numbers=(((1,), (0,)), ((), ())),
        preferred_element_type=jnp.float32,
    )
    o_ref[...] = (acc + b_ref[...]).astype(o_ref.dtype)


def _mm_kernel_multi_k(x_ref, w_ref, b_ref, o_ref, acc_ref):
    k = pl.program_id(2)

    @pl.when(k == 0)
    def _():
        acc_ref[...] = jnp.zeros_like(acc_ref)

    acc_ref[...] += jax.lax.dot_general(
        x_ref[...], w_ref[...],
        dimension_numbers=(((1,), (0,)), ((), ())),
        preferred_element_type=jnp.float32,
    )

    @pl.when(k == pl.num_programs(2) - 1)
    def _():
        o_ref[...] = (acc_ref[...] + b_ref[...]).astype(o_ref.dtype)


# ----------------------------------------------------------------------------
# One-time weight preparation (static mask / weights -> cache this).
# ----------------------------------------------------------------------------
class PackedMaskedLinear(NamedTuple):
    w_kn: jax.Array      # [Kp, Np] = pad(([W*mask | W_cond]).T), compute dtype
    b2d: jax.Array       # [1, Np] f32 bias (zero-padded)
    k_total: int         # in_features (+ cond_in_features)
    n_out: int           # out_features
    has_cond: bool


def prepare_masked_linear(weight, mask, bias, cond_weight=None,
                          *, compute_dtype=jnp.bfloat16) -> PackedMaskedLinear:
    """Fold mask, fuse cond weight, transpose to [K, N], pad, cast — once."""
    w = weight.astype(jnp.float32) * mask.astype(jnp.float32)   # fold in f32
    if cond_weight is not None:
        w = jnp.concatenate([w, cond_weight.astype(jnp.float32)], axis=1)
    N, K = w.shape
    Kp, Np = _round_up(K, 128), _round_up(N, 128)
    w_kn = jnp.pad(w.T, ((0, Kp - K), (0, Np - N)))
    if compute_dtype is not None:
        w_kn = w_kn.astype(compute_dtype)
    b2d = jnp.pad(bias.astype(jnp.float32).reshape(1, N), ((0, 0), (0, Np - N)))
    return PackedMaskedLinear(w_kn, b2d, K, N, cond_weight is not None)


# ----------------------------------------------------------------------------
# Forward with pre-packed weights.
# ----------------------------------------------------------------------------
def masked_linear_packed(inputs, packed: PackedMaskedLinear, cond_inputs=None,
                         *, tm_max=512, tn_max=512, tk_max=2048,
                         vmem_limit_bytes=48 * 1024 * 1024):
    out_dtype = inputs.dtype

    x = inputs
    if packed.has_cond:
        if cond_inputs is None:
            raise ValueError("packed weights include a cond path; cond_inputs is required")
        x = jnp.concatenate([x, cond_inputs], axis=1)
    elif cond_inputs is not None:
        raise ValueError("cond_inputs given but no cond_weight was packed")

    B, K = x.shape
    if K != packed.k_total:
        raise ValueError(f"feature mismatch: got {K}, packed expects {packed.k_total}")

    w = packed.w_kn
    compute_dtype = w.dtype
    x = x.astype(compute_dtype)

    Kp, Np = w.shape
    N = packed.n_out

    # --- tiling: pad only to layout granularity, pick tiles as divisors --------
    sub = _sublane(compute_dtype)
    Bp = _round_up(B, sub)

    tm = _pick_tile(Bp, sub, tm_max)                       # whole batch if it fits
    tn = _pick_tile(Np, 128, tn_max)
    tk = Kp if Kp <= tk_max else _pick_tile(Kp, 128, tk_max)

    # Keep both TensorCores busy on v7x: ensure a "parallel" axis has >= 2 steps.
    if Bp // tm == 1 and Np // tn == 1:
        tn2 = _pick_split_tile(Np, 128, tn_max)
        if tn2 is not None:
            tn = tn2
        else:
            tm2 = _pick_split_tile(Bp, sub, tm_max)
            if tm2 is not None:
                tm = tm2

    if (Bp, Kp) != (B, K):
        x = jnp.pad(x, ((0, Bp - B), (0, Kp - K)))

    mg, ng, kg = Bp // tm, Np // tn, Kp // tk

    # --- cost estimate incl. re-streaming (x read ng times, W read mg times) ---
    itemsize = jnp.dtype(compute_dtype).itemsize
    cost = pl.CostEstimate(
        flops=2 * Bp * Np * Kp,
        transcendentals=0,
        bytes_accessed=(ng * Bp * Kp * itemsize
                        + mg * Kp * Np * itemsize
                        + mg * Np * 4
                        + Bp * Np * jnp.dtype(out_dtype).itemsize),
    )

    if kg == 1:
        grid = (mg, ng)
        in_specs = [
            pl.BlockSpec((tm, Kp), lambda i, j: (i, 0)),    # x (fused [x | cond_x])
            pl.BlockSpec((Kp, tn), lambda i, j: (0, j)),    # packed W [K, N]
            pl.BlockSpec((1, tn), lambda i, j: (0, j)),     # bias
        ]
        out_specs = pl.BlockSpec((tm, tn), lambda i, j: (i, j))
        scratch = []
        kernel = _mm_kernel_single_k
        dims = ("parallel", "parallel")
    else:
        grid = (mg, ng, kg)
        in_specs = [
            pl.BlockSpec((tm, tk), lambda i, j, k: (i, k)),
            pl.BlockSpec((tk, tn), lambda i, j, k: (k, j)),
            pl.BlockSpec((1, tn), lambda i, j, k: (0, j)),
        ]
        out_specs = pl.BlockSpec((tm, tn), lambda i, j, k: (i, j))
        scratch = [pltpu.VMEM((tm, tn), jnp.float32)]
        kernel = _mm_kernel_multi_k
        dims = ("parallel", "parallel", "arbitrary")

    out = pl.pallas_call(
        kernel,
        out_shape=jax.ShapeDtypeStruct((Bp, Np), out_dtype),
        grid_spec=pltpu.PrefetchScalarGridSpec(
            num_scalar_prefetch=0,
            grid=grid,
            in_specs=in_specs,
            out_specs=out_specs,
            scratch_shapes=scratch,
        ),
        compiler_params=pltpu.CompilerParams(
            dimension_semantics=dims,
            vmem_limit_bytes=vmem_limit_bytes,   # <= 48 MiB: safe on v7x's 64 MiB VMEM
        ),
        cost_estimate=cost,
    )(x, w, packed.b2d)

    if (Bp, Np) != (B, N):
        out = out[:B, :N]
    return out


# ----------------------------------------------------------------------------
# Convenience wrapper matching MaskedLinear.forward (preps weights per call;
# prefer prepare_masked_linear + masked_linear_packed when weights are reused).
# ----------------------------------------------------------------------------
def masked_linear(inputs, weight, mask, bias, cond_inputs=None, cond_weight=None,
                  *, compute_dtype=jnp.bfloat16, **kwargs):
    if cond_inputs is not None and cond_weight is None:
        raise ValueError("cond_inputs provided but cond_weight is None")
    packed = prepare_masked_linear(
        weight, mask, bias,
        cond_weight if cond_inputs is not None else None,
        compute_dtype=compute_dtype,
    )
    return masked_linear_packed(inputs, packed, cond_inputs, **kwargs)


# ----------------------------------------------------------------------------
# Deterministic parameter init (mimics nn.Linear's kaiming-uniform bounds)
# ----------------------------------------------------------------------------
def init_params(key, in_features, out_features, cond_in_features):
    k_w, k_b, k_cw = jax.random.split(key, 3)
    bound = 1.0 / jnp.sqrt(in_features)
    weight = jax.random.uniform(k_w, (out_features, in_features),
                                jnp.float32, -bound, bound)
    bias = jax.random.uniform(k_b, (out_features,), jnp.float32, -bound, bound)
    cond_bound = 1.0 / jnp.sqrt(cond_in_features)
    cond_weight = jax.random.uniform(k_cw, (out_features, cond_in_features),
                                     jnp.float32, -cond_bound, cond_bound)
    # MADE-style autoregressive mask (lower-triangular connectivity pattern).
    mask = (jnp.arange(out_features)[:, None] >=
            jnp.arange(in_features)[None, :]).astype(jnp.float32)
    return weight, bias, cond_weight, mask


if __name__ == "__main__":
    key = jax.random.PRNGKey(0)

    # --- Small shapes consistent with a MADE flow layer -----------------------
    B, IN_F, OUT_F, COND_F = 8, 32, 32, 16
    k_x, k_c, k_p, k_x2, k_c2, k_p2 = jax.random.split(key, 6)
    x = jax.random.normal(k_x, (B, IN_F), jnp.float32)
    cond_x = jax.random.normal(k_c, (B, COND_F), jnp.float32)
    weight, bias, cond_weight, mask = init_params(k_p, IN_F, OUT_F, COND_F)

    ref_nocond = x @ (weight * mask).T + bias[None, :]
    ref_cond = ref_nocond + cond_x @ cond_weight.T

    # f32 compute path (tight tolerance) — exercises the cached-prep API.
    packed_f32 = prepare_masked_linear(weight, mask, bias, cond_weight,
                                       compute_dtype=jnp.float32)
    out_cond = masked_linear_packed(x, packed_f32, cond_x)
    out_cond_again = masked_linear_packed(x, packed_f32, cond_x)   # reuse packed weights
    out_nocond = masked_linear(x, weight, mask, bias, compute_dtype=jnp.float32)
    jax.block_until_ready((out_cond, out_cond_again, out_nocond))
    assert jnp.allclose(out_nocond, ref_nocond, atol=1e-5, rtol=1e-5)
    assert jnp.allclose(out_cond, ref_cond, atol=1e-5, rtol=1e-5)
    assert jnp.allclose(out_cond_again, ref_cond, atol=1e-5, rtol=1e-5)

    # Default bf16 compute path (f32 accumulate), looser tolerance.
    out_cond_bf16 = masked_linear(x, weight, mask, bias, cond_x, cond_weight)
    jax.block_until_ready(out_cond_bf16)
    assert jnp.allclose(out_cond_bf16, ref_cond, atol=5e-2, rtol=5e-2)

    # --- Medium shapes: exercises M/N tiling, padding, megacore N-split -------
    B2, IN2, OUT2, COND2 = 256, 512, 384, 192
    x2 = jax.random.normal(k_x2, (B2, IN2), jnp.float32)
    cond_x2 = jax.random.normal(k_c2, (B2, COND2), jnp.float32)
    w2, b2, cw2, m2 = init_params(k_p2, IN2, OUT2, COND2)
    ref2 = x2 @ (w2 * m2).T + b2[None, :] + cond_x2 @ cw2.T

    packed2_f32 = prepare_masked_linear(w2, m2, b2, cw2, compute_dtype=jnp.float32)
    out2 = masked_linear_packed(x2, packed2_f32, cond_x2)
    jax.block_until_ready(out2)
    assert jnp.allclose(out2, ref2, atol=1e-4, rtol=1e-4)

    # bf16 compute (default) — weight-stream-bound layer's biggest lever.
    packed2_bf16 = prepare_masked_linear(w2, m2, b2, cw2)
    out2_bf16 = masked_linear_packed(x2, packed2_bf16, cond_x2)
    jax.block_until_ready(out2_bf16)
    assert jnp.allclose(out2_bf16, ref2, atol=5e-2, rtol=5e-2)

    # Force the multi-K-block (accumulator) kernel path to make sure it runs too.
    out2_mk = masked_linear_packed(x2, packed2_f32, cond_x2, tk_max=256)
    jax.block_until_ready(out2_mk)
    assert jnp.allclose(out2_mk, ref2, atol=1e-4, rtol=1e-4)

    print("KERNEL_OK")
</pallas_src>

<mosaic_0001>
module attributes {stable_mosaic.version = 11 : i64} {
  func.func @_mm_kernel_single_k(%arg0: i32, %arg1: i32, %arg2: memref<8x128xf32, #tpu.memory_space<vmem>>, %arg3: memref<128x128xf32, #tpu.memory_space<vmem>>, %arg4: memref<1x128xf32, #tpu.memory_space<vmem>>, %arg5: memref<8x128xf32, #tpu.memory_space<vmem>>) attributes {dimension_semantics = [#tpu.dimension_semantics<parallel>, #tpu.dimension_semantics<parallel>], iteration_bounds = array<i64: 1, 1>, scalar_prefetch = 0 : i64, scratch_operands = 0 : i64, tpu.core_type = #tpu.core_type<tc>, window_params = [{transform_indices = @transform_0, window_bounds = array<i64: 8, 128>}, {transform_indices = @transform_1, window_bounds = array<i64: 128, 128>}, {transform_indices = @transform_2, window_bounds = array<i64: 1, 128>}, {transform_indices = @transform_3, window_bounds = array<i64: 8, 128>}]} {
    %c0 = arith.constant 0 : index
    %c0_0 = arith.constant 0 : index
    %0 = vector.load %arg2[%c0, %c0_0] : memref<8x128xf32, #tpu.memory_space<vmem>>, vector<8x128xf32>
    %c0_1 = arith.constant 0 : index
    %c0_2 = arith.constant 0 : index
    %1 = vector.load %arg3[%c0_1, %c0_2] : memref<128x128xf32, #tpu.memory_space<vmem>>, vector<128x128xf32>
    %cst = arith.constant dense<0.000000e+00> : vector<8x128xf32>
    %2 = tpu.matmul %0, %1, %cst {dimension_numbers = #tpu.dot_dimension_numbers<[1], [0], [0], [1], [0, 0, 1, 1], [], []>} : vector<8x128xf32>, vector<128x128xf32>, vector<8x128xf32> -> vector<8x128xf32>
    %c0_3 = arith.constant 0 : index
    %c0_4 = arith.constant 0 : index
    %3 = vector.load %arg4[%c0_3, %c0_4] : memref<1x128xf32, #tpu.memory_space<vmem>>, vector<1x128xf32>
    %4 = vector.broadcast %3 : vector<1x128xf32> to vector<8x128xf32>
    %5 = arith.addf %2, %4 : vector<8x128xf32>
    %c0_5 = arith.constant 0 : index
    %c0_6 = arith.constant 0 : index
    %6 = vector.load %arg5[%c0_5, %c0_6] : memref<8x128xf32, #tpu.memory_space<vmem>>, vector<8x128xf32>
    tpu.vector_store %arg5[%c0_5, %c0_6], %5 {strides = array<i32>} : memref<8x128xf32, #tpu.memory_space<vmem>>, vector<8x128xf32>,
    return
  }
  func.func @transform_0(%arg0: i32, %arg1: i32) -> (i32, i32) {
    %c0_i32 = arith.constant 0 : i32
    %c0_i32_0 = arith.constant 0 : i32
    return %arg0, %c0_i32 : i32, i32
  }
  func.func @transform_1(%arg0: i32, %arg1: i32) -> (i32, i32) {
    %c0_i32 = arith.constant 0 : i32
    %c0_i32_0 = arith.constant 0 : i32
    return %c0_i32, %arg1 : i32, i32
  }
  func.func @transform_2(%arg0: i32, %arg1: i32) -> (i32, i32) {
    %c0_i32 = arith.constant 0 : i32
    %c0_i32_0 = arith.constant 0 : i32
    return %c0_i32, %arg1 : i32, i32
  }
  func.func @transform_3(%arg0: i32, %arg1: i32) -> (i32, i32) {
    %c0_i32 = arith.constant 0 : i32
    return %arg0, %arg1 : i32, i32
  }
}

</mosaic_0001>

<llo_original>
// kernel: tpu_custom_call.1
$region0: #{tpu_custom_call.1}
  #allocation0 [shape = 'u32[]', space=smem, size = 0x4, offset = 0x4, fixed_abs, tag = 'smem constant byte address 0x4 - core index']
  #allocation1 [shape = 'u32[144,128]{1,0:T(1,128)}', space=vmem, size = 0x12000, scoped, tag = 'internal scratch']
  %s0 = inlined_call_operand.hbm [shape: f32[8,128], index: 0, kind: input, shape index: {}]
  %s1 = inlined_call_operand.hbm [shape: f32[128,128], index: 1, kind: input, shape index: {}]
  %s2 = inlined_call_operand.vmem [shape: f32[1,128], index: 2, kind: input, shape index: {}]
  %s3 = inlined_call_operand.hbm [shape: f32[8,128], index: 3, kind: output, shape index: {}]
  %s4 = sld [smem:[#allocation0]]
  $region30: #{tpu_custom_call.1} parent=0
    _
  %s6 = ssub.s32 1, %s4
  %s7 = scalar_select 0, %s6, %s4
  $region1: #{tpu_custom_call.1} parent=0
    #allocation2 [shape = 'u8[4096]{0}', space=vmem, size = 0x1000, scoped, tag = 'input window, operand 0, single buffered']
    #allocation3 [shape = 's32[1]{0}', space=sflag, size = 0x4, scoped, tag = 'scoped memory for tpu_custom_call.1']
    #allocation4 [shape = 's32[1]{0}', space=sflag, size = 0x4, scoped, tag = 'scoped memory for tpu_custom_call.1']
    #allocation5 [shape = 'u8[65536]{0}', space=vmem, size = 0x10000, scoped, tag = 'input window, operand 1, single buffered']
    #allocation6 [shape = 's32[1]{0}', space=sflag, size = 0x4, scoped, tag = 'scoped memory for tpu_custom_call.1']
    #allocation7 [shape = 'u8[4096]{0}', space=vmem, size = 0x1000, scoped, tag = 'output window, operand 0, single buffered']
    %8 = vsyncpa [#allocation3], 0
    %9 = vsyncpa [#allocation6], 0
    %10 = vsyncpa [#allocation4], 0
    // Predicated region
    $region2: #{tpu_custom_call.1} parent=1 // pred_check
      _
    $region3: #{tpu_custom_call.1} parent=1 // pred_check_branch
      %12 = sbr.rel (0) target = $region5
    $region4: #{tpu_custom_call.1} parent=1 // pred_region
      %s14 = ssub.s32 128, 128
      %15 = vsyncadd [#allocation3], %s14
      %s17 = sshll.u32 [#allocation2], 4
      %s18 = int_to_ptr.vmem [resolvable:$true] %s17
      %20 = dma.hbm_to_vmem [thread:$0]  %s0, 128, %s18, [#allocation3]
    $region5: #{tpu_custom_call.1} parent=1 // pred_fallthru
      _
    // Predicated region
    $region6: #{tpu_custom_call.1} parent=1 // pred_check
      _
    $region7: #{tpu_custom_call.1} parent=1 // pred_check_branch
      %22 = sbr.rel (0) target = $region9
    $region8: #{tpu_custom_call.1} parent=1 // pred_region
      %s24 = ssub.s32 2048, 2048
      %25 = vsyncadd [#allocation6], %s24
      %s26 = sshll.u32 [#allocation5], 4
      %s27 = int_to_ptr.vmem [resolvable:$true] %s26
      %32 = dma.hbm_to_vmem [thread:$0]  %s1, 2048, %s27, [#allocation6], 128, 128, 8
    $region9: #{tpu_custom_call.1} parent=1 // pred_fallthru
      _
    // Predicated region
    $region10: #{tpu_custom_call.1} parent=1 // pred_check
      _
    $region11: #{tpu_custom_call.1} parent=1 // pred_check_branch
      %34 = sbr.rel (0) target = $region13
    $region12: #{tpu_custom_call.1} parent=1 // pred_region
      _
    $region13: #{tpu_custom_call.1} parent=1 // pred_fallthru
      _
    // Predicated region
    $region14: #{tpu_custom_call.1} parent=1 // pred_check
      _
    $region15: #{tpu_custom_call.1} parent=1 // pred_check_branch
      %36 = sbr.rel (0) target = $region17
    $region16: #{tpu_custom_call.1} parent=1 // pred_region
      %37 = dma.done [#allocation3], 128
    $region17: #{tpu_custom_call.1} parent=1 // pred_fallthru
      _
    // Predicated region
    $region18: #{tpu_custom_call.1} parent=1 // pred_check
      _
    $region19: #{tpu_custom_call.1} parent=1 // pred_check_branch
      %39 = sbr.rel (0) target = $region21
    $region20: #{tpu_custom_call.1} parent=1 // pred_region
      %40 = dma.done [#allocation6], 2048
    $region21: #{tpu_custom_call.1} parent=1 // pred_fallthru
      _
    %v41 = vld [vmem:[#allocation2] sm:$0xff]
    %v42 = vld [vmem:[#allocation5] sm:$0xff]
    %v43 = vld [vmem:[#allocation5 + $0x8] sm:$0xff]
    %v44 = vld [vmem:[#allocation5 + $0x10] sm:$0xff]
    %v45 = vld [vmem:[#allocation5 + $0x18] sm:$0xff]
    %v46 = vld [vmem:[#allocation5 + $0x20] sm:$0xff]
    %v47 = vld [vmem:[#allocation5 + $0x28] sm:$0xff]
    %v48 = vld [vmem:[#allocation5 + $0x30] sm:$0xff]
    %v49 = vld [vmem:[#allocation5 + $0x38] sm:$0xff]
    %v50 = vld [vmem:[#allocation5 + $0x40] sm:$0xff]
    %v51 = vld [vmem:[#allocation5 + $0x48] sm:$0xff]
    %v52 = vld [vmem:[#allocation5 + $0x50] sm:$0xff]
    %v53 = vld [vmem:[#allocation5 + $0x58] sm:$0xff]
    %v54 = vld [vmem:[#allocation5 + $0x60] sm:$0xff]
    %v55 = vld [vmem:[#allocation5 + $0x68] sm:$0xff]
    %v56 = vld [vmem:[#allocation5 + $0x70] sm:$0xff]
    %v57 = vld [vmem:[#allocation5 + $0x78] sm:$0xff]
    %v58 = vld [vmem:[%s2] sm:$0x1]
    %v60 = vlaneseq
    %v61 = vshrl.u32 %v60, 7
    %v62 = vsub.s32 0, %v61
    %v63 = vrot.slane %v58, %v62
    %65 = vmatprep.subr.mxu0 0.0
    %66 = vmatpush1.msra.mxu0 %v57
    %67 = vmatprep.subr.mxu0 0.0
    %68 = vmatpush1.msra.mxu0 %v56
    %69 = vmatprep.subr.mxu0 0.0
    %70 = vmatpush1.msra.mxu0 %v55
    %71 = vmatprep.subr.mxu0 0.0
    %72 = vmatpush1.msra.mxu0 %v54
    %73 = vmatprep.subr.mxu0 0.0
    %74 = vmatpush1.msra.mxu0 %v53
    %75 = vmatprep.subr.mxu0 0.0
    %76 = vmatpush1.msra.mxu0 %v52
    %77 = vmatprep.subr.mxu0 0.0
    %78 = vmatpush1.msra.mxu0 %v51
    %79 = vmatprep.subr.mxu0 0.0
    %80 = vmatpush1.msra.mxu0 %v50
    %81 = vmatprep.subr.mxu0 0.0
    %82 = vmatpush1.msra.mxu0 %v49
    %83 = vmatprep.subr.mxu0 0.0
    %84 = vmatpush1.msra.mxu0 %v48
    %85 = vmatprep.subr.mxu0 0.0
    %86 = vmatpush1.msra.mxu0 %v47
    %87 = vmatprep.subr.mxu0 0.0
    %88 = vmatpush1.msra.mxu0 %v46
    %89 = vmatprep.subr.mxu0 0.0
    %90 = vmatpush1.msra.mxu0 %v45
    %91 = vmatprep.subr.mxu0 0.0
    %92 = vmatpush1.msra.mxu0 %v44
    %93 = vmatprep.subr.mxu0 0.0
    %94 = vmatpush1.msra.mxu0 %v43
    %95 = vmatprep.subr.mxu0 0.0
    %96 = vmatpush1.msra.mxu0 %v42
    %97 = vmatprep.subr.mxu0 0.0
    %98 = vmatpush2.msra.mxu0 0.0
    %99 = vmatprep.subr.mxu0 0.0
    %100 = vmatpush2.msra.mxu0 0.0
    %101 = vmatprep.subr.mxu0 0.0
    %102 = vmatpush2.msra.mxu0 0.0
    %103 = vmatprep.subr.mxu0 0.0
    %104 = vmatpush2.msra.mxu0 0.0
    %105 = vmatprep.subr.mxu0 0.0
    %106 = vmatpush2.msra.mxu0 0.0
    %107 = vmatprep.subr.mxu0 0.0
    %108 = vmatpush2.msra.mxu0 0.0
    %109 = vmatprep.subr.mxu0 0.0
    %110 = vmatpush2.msra.mxu0 0.0
    %111 = vmatprep.subr.mxu0 0.0
    %112 = vmatpush2.msra.mxu0 0.0
    %113 = vmatprep.subr.mxu0 0.0
    %114 = vmatpush2.msra.mxu0 0.0
    %115 = vmatprep.subr.mxu0 0.0
    %116 = vmatpush2.msra.mxu0 0.0
    %117 = vmatprep.subr.mxu0 0.0
    %118 = vmatpush2.msra.mxu0 0.0
    %119 = vmatprep.subr.mxu0 0.0
    %120 = vmatpush2.msra.mxu0 0.0
    %121 = vmatprep.subr.mxu0 0.0
    %122 = vmatpush2.msra.mxu0 0.0
    %123 = vmatprep.subr.mxu0 0.0
    %124 = vmatpush2.msra.mxu0 0.0
    %125 = vmatprep.subr.mxu0 0.0
    %126 = vmatpush2.msra.mxu0 0.0
    %127 = vmatprep.subr.mxu0 0.0
    %128 = vmatpush2.msra.mxu0 0.0
    %129 = vmatprep.mubr.f32.mxu0 0.0
    %130 = vmatmul.mubr.f32.gmra.mxu0 %v41
    %v131 = vpop.f32.mrf.mxu0
    %v132 = vadd.f32 %v63, %v131
    %v133 = vpop.f32.mrf.mxu0
    %134 = vdwg.mxu0
    %135 = vst [vmem:[#allocation7] sm:$0xff] %v132
    // Predicated region
    $region22: #{tpu_custom_call.1} parent=1 // pred_check
      _
    $region23: #{tpu_custom_call.1} parent=1 // pred_check_branch
      %137 = sbr.rel (0) target = $region25
    $region24: #{tpu_custom_call.1} parent=1 // pred_region
      %s139 = ssub.s32 128, 128
      %140 = vsyncadd [#allocation4], %s139
      %s142 = sshll.u32 [#allocation7], 4
      %s143 = int_to_ptr.vmem [resolvable:$true] %s142
      %145 = dma.vmem_to_hbm [thread:$0]  %s143, 128, %s3, [#allocation4]
    $region25: #{tpu_custom_call.1} parent=1 // pred_fallthru
      _
    // Predicated region
    $region26: #{tpu_custom_call.1} parent=1 // pred_check
      _
    $region27: #{tpu_custom_call.1} parent=1 // pred_check_branch
      %147 = sbr.rel (0) target = $region29
    $region28: #{tpu_custom_call.1} parent=1 // pred_region
      %148 = dma.done [#allocation4], 128
    $region29: #{tpu_custom_call.1} parent=1 // pred_fallthru
      _
    %149 = vsyncpa [#allocation3], 1
    %150 = vsyncpa [#allocation6], 1
    %151 = vsyncpa [#allocation4], 1

</llo_original>
